<compile_context>
chip_gen: v5e
topology: v5e:2x2
jax: 0.10.0
libtpu: 0.0.40
codegen_flags: <defaults>
</compile_context>

<pallas_src>
import functools

import jax
import jax.numpy as jnp
from jax import lax
from jax.experimental import pallas as pl
from jax.experimental.pallas import tpu as pltpu

NEG_SLOPE = 0.1  # LeakyReLU(0.1)


def _leaky(x):
    return jnp.where(x > 0, x, NEG_SLOPE * x)


def _round_up(v, m):
    return ((v + m - 1) // m) * m


# ----------------------------- fused Pallas kernel ------------------------------

def _fused_forward_kernel(x_ref, a_ref, w_ref, out_ref, *, meta):
    """Entire Model forward in one kernel.

    All parameters live in one packed (rows, PADW) f32 VMEM buffer; `meta`
    carries static (row_offset, rows, cols) slices for each tensor.

    GNN layers keep every head stacked along the lane axis:
      xp for all heads        : one (N,Fin)@(Fin,H*F) MXU matmul
      attention for all heads : one (N,H*E) tensor; block-ones selector matmuls
                                replace per-head lane slices / lane reductions
      H diag(B) H^T xp        : two stacked matmuls + a block-diagonal mask,
                                no per-head slicing, no in-kernel concat
      diag(D)                 : dropped (== 1 after row-normalisation)
    """

    def slab(s):
        off, r, c = s
        return w_ref[off:off + r, 0:c]

    x = x_ref[...]                       # (N, Fin)
    Hs = a_ref[...]                      # (N, E) incidence matrix
    n = Hs.shape[0]

    # ---- linear_list1: Linear -> LeakyReLU (dropout=None, skipped) ----
    for (ws, bs) in meta["lin1"]:
        x = _leaky(jnp.dot(x, slab(ws), preferred_element_type=jnp.float32) + slab(bs))

    if meta["gnn"]:
        ones_n1 = jnp.ones((n, 1), jnp.float32)
        # Per-edge degree -> EUP reciprocal, hoisted out of the layer loop.
        edge_deg = lax.dot_general(ones_n1, Hs, (((0,), (0,)), ((), ())),
                                   preferred_element_type=jnp.float32)         # (1, E)
        inv_edge_deg = pl.reciprocal(edge_deg, approx=True)                    # (1, E)

    # ---- gnn_list: head-stacked HCHA attention -> w_cat -> LeakyReLU ----
    for g in meta["gnn"]:
        p_cat = slab(g["p_cat"])      # (Fin, H*F) head-stacked projections
        a1_cat = slab(g["a1"])        # (1,   H*F) a1_h^T in head h's block
        pa2 = slab(g["pa2"])          # (Fin, H)   column h = p_h @ a2_h
        w_cat = slab(g["wcat"])       # (H*F, F)
        bd_FE = slab(g["bd_FE"])      # (H*F, H*E) block-ones selector
        bd_HE = slab(g["bd_HE"])      # (H,   H*E) block-ones broadcaster
        bd_EH = slab(g["bd_EH"])      # (H*E, H)   block-ones reducer
        bd_mask = slab(g["mask"])     # (H*E, H*F) block-diagonal ones mask
        tileE = slab(g["tileE"])      # (E,   H*E) horizontally tiled identity

        # Lane-stacked copies of incidence / inverse edge degree (one per head).
        Hs_t = jnp.dot(Hs, tileE, preferred_element_type=jnp.float32)           # (N, H*E)
        inv_deg_t = jnp.dot(inv_edge_deg, tileE,
                            preferred_element_type=jnp.float32)                 # (1, H*E)

        xp_all = jnp.dot(x, p_cat, preferred_element_type=jnp.float32)          # (N, H*F)

        # s1[n, h] = xp_h[n] . a1_h, broadcast to head h's edge block.
        s1_b = jnp.dot(xp_all * a1_cat, bd_FE,
                       preferred_element_type=jnp.float32)                      # (N, H*E)

        # s2[h, e] = (sum_n Hs[n, e] * (x[n] . (p_h a2_h))) / edge_degree[e]
        # (algebraically equals (hyperedge_feature @ p_h @ a2_h)^T).
        xpa2_b = jnp.dot(jnp.dot(x, pa2, preferred_element_type=jnp.float32),
                         bd_HE, preferred_element_type=jnp.float32)             # (N, H*E)
        s2 = lax.dot_general(ones_n1, xpa2_b * Hs_t, (((0,), (0,)), ((), ())),
                             preferred_element_type=jnp.float32)                # (1, H*E)
        s2 = s2 * inv_deg_t

        att = s1_b + s2                                                         # (N, H*E)
        att = jnp.tanh(att * 0.125) * 8.0
        att = _leaky(att)
        Hexp = jnp.exp(att) * Hs_t                                              # (N, H*E)

        # Row-normalise each head's block over its incident edges.
        rowsum = jnp.dot(Hexp, bd_EH, preferred_element_type=jnp.float32)       # (N, H)
        Hm = Hexp * jnp.dot(pl.reciprocal(rowsum, approx=True), bd_HE,
                            preferred_element_type=jnp.float32)                 # (N, H*E)

        # diag(B) = 1 / per-edge column sums of Hm, kept as a column so it scales
        # rows of the small (H*E, H*F) intermediate instead of a (N, H*E) copy.
        col = lax.dot_general(Hm, ones_n1, (((0,), (0,)), ((), ())),
                              preferred_element_type=jnp.float32)               # (H*E, 1)
        b_col = pl.reciprocal(col, approx=True)

        # out_h = Hm_h @ diag(B_h) @ Hm_h^T @ xp_h for all heads at once; the
        # unwanted cross-head blocks of t_all are zeroed by the block-diag mask.
        t_all = lax.dot_general(Hm, xp_all, (((0,), (0,)), ((), ())),
                                preferred_element_type=jnp.float32)             # (H*E, H*F)
        t_all = t_all * bd_mask * b_col
        out_all = jnp.dot(Hm, t_all, preferred_element_type=jnp.float32)        # (N, H*F)

        # Head concat is implicit (lane-stacked layout) -> w_cat -> LeakyReLU.
        x = _leaky(jnp.dot(_leaky(out_all), w_cat,
                           preferred_element_type=jnp.float32))                 # (N, F)

    # ---- linear_list2: Linear only (no activation) ----
    for (ws, bs) in meta["lin2"]:
        x = jnp.dot(x, slab(ws), preferred_element_type=jnp.float32) + slab(bs)

    # Lane-dense writeback: the last linear is already zero-padded to the padded
    # output width at pack time; pad here only if the model ends without one.
    oc = out_ref.shape[1]
    if x.shape[1] < oc:
        x = jnp.concatenate(
            [x, jnp.zeros((x.shape[0], oc - x.shape[1]), x.dtype)], axis=1)
    out_ref[...] = x


# ------------------------------ weight packing -------------------------------

class _Packer:
    """Packs many small 2-D f32 tensors into one row-stacked tile-aligned buffer."""

    def __init__(self):
        self._items = []
        self._row = 0

    def add(self, arr):
        arr = jnp.asarray(arr, jnp.float32)
        r, c = arr.shape
        off = self._row
        self._row += _round_up(max(r, 1), 8)
        self._items.append((off, arr))
        return (off, r, c)

    def finalize(self):
        padw = 128
        for _, a in self._items:
            padw = max(padw, _round_up(a.shape[1], 128))
        rows = max(self._row, 8)
        buf = jnp.zeros((rows, padw), jnp.float32)
        for off, a in self._items:
            buf = buf.at[off:off + a.shape[0], :a.shape[1]].set(a)
        return buf


def _pack_model(params, edge_size, in_dim):
    """Head-stack the GNN weights, build block constants, pack everything."""
    pk = _Packer()
    meta = {"lin1": [], "gnn": [], "lin2": []}

    for (w, b) in params["lin1"]:
        meta["lin1"].append((pk.add(w), pk.add(b)))

    for (heads, w_cat) in params["gnn"]:
        num_heads = len(heads)
        fout = heads[0][0].shape[1]
        E = edge_size
        p_cat = jnp.concatenate([p for (p, _, _) in heads], axis=1)         # (Fin, H*F)
        a1_cat = jnp.concatenate([a1.T for (_, a1, _) in heads], axis=1)    # (1,   H*F)
        pa2 = jnp.concatenate([p @ a2 for (p, _, a2) in heads], axis=1)     # (Fin, H)
        eye_h = jnp.eye(num_heads, dtype=jnp.float32)
        bd_HE = jnp.repeat(eye_h, E, axis=1)                                # (H,   H*E)
        bd_EH = bd_HE.T                                                     # (H*E, H)
        bd_FE = jnp.repeat(jnp.repeat(eye_h, fout, axis=0), E, axis=1)      # (H*F, H*E)
        bd_mask = jnp.repeat(jnp.repeat(eye_h, E, axis=0), fout, axis=1)    # (H*E, H*F)
        tileE = jnp.tile(jnp.eye(E, dtype=jnp.float32), (1, num_heads))     # (E,   H*E)
        meta["gnn"].append(dict(
            p_cat=pk.add(p_cat), a1=pk.add(a1_cat), pa2=pk.add(pa2),
            wcat=pk.add(w_cat), bd_FE=pk.add(bd_FE), bd_HE=pk.add(bd_HE),
            bd_EH=pk.add(bd_EH), mask=pk.add(bd_mask), tileE=pk.add(tileE)))

    if params["lin2"]:
        out_dim = params["lin2"][-1][0].shape[1]
    elif params["gnn"]:
        out_dim = params["gnn"][-1][0][0][0].shape[1]
    elif params["lin1"]:
        out_dim = params["lin1"][-1][0].shape[1]
    else:
        out_dim = in_dim
    out_pad = _round_up(out_dim, 128)

    n_lin2 = len(params["lin2"])
    for i, (w, b) in enumerate(params["lin2"]):
        if i == n_lin2 - 1:
            # Zero-pad the last linear to a 128-multiple output width so the
            # kernel writeback is an unmasked, lane-dense store.
            w = jnp.pad(w, ((0, 0), (0, out_pad - out_dim)))
            b = jnp.pad(b, ((0, 0), (0, out_pad - out_dim)))
        meta["lin2"].append((pk.add(w), pk.add(b)))

    return pk.finalize(), meta, out_dim, out_pad


# ------------------------------ Model (glue) -------------------------------

def init_model(key, linear_list1, linear_list2, gnn_list, num_heads=4, scale=0.1):
    params = {"lin1": [], "lin2": [], "gnn": []}

    def nkey():
        nonlocal key
        key, sub = jax.random.split(key)
        return sub

    for i in range(len(linear_list1) - 1):
        fin, fout = linear_list1[i], linear_list1[i + 1]
        w = scale * jax.random.normal(nkey(), (fin, fout), jnp.float32)
        b = scale * jax.random.normal(nkey(), (1, fout), jnp.float32)
        params["lin1"].append((w, b))

    for i in range(len(gnn_list) - 1):
        fin, fout = gnn_list[i], gnn_list[i + 1]
        heads = []
        for _ in range(num_heads):
            p = scale * jax.random.normal(nkey(), (fin, fout), jnp.float32)
            a1 = scale * jax.random.normal(nkey(), (fout, 1), jnp.float32)
            a2 = scale * jax.random.normal(nkey(), (fout, 1), jnp.float32)
            heads.append((p, a1, a2))
        w_cat = scale * jax.random.normal(nkey(), (fout * num_heads, fout), jnp.float32)
        params["gnn"].append((heads, w_cat))

    for i in range(len(linear_list2) - 1):
        fin, fout = linear_list2[i], linear_list2[i + 1]
        w = scale * jax.random.normal(nkey(), (fin, fout), jnp.float32)
        b = scale * jax.random.normal(nkey(), (1, fout), jnp.float32)
        params["lin2"].append((w, b))

    return params


def model_forward(params, x, A):
    n, in_dim = x.shape
    buf, meta, out_dim, out_pad = _pack_model(params, A.shape[1], in_dim)

    kernel = functools.partial(_fused_forward_kernel, meta=meta)
    vmem = pl.BlockSpec(memory_space=pltpu.MemorySpace.VMEM)

    resident_bytes = 4 * (x.size + A.size + buf.size + n * out_pad)
    vmem_limit = int(min(max(4 * resident_bytes, 8 << 20), 64 << 20))

    # TODO(synk): for large node counts add an N-tiled grid ("parallel" semantics,
    # two-pass column sums for edge_deg / diag(B)) and bf16 matmul operands on v6e/v7x.
    out = pl.pallas_call(
        kernel,
        out_shape=jax.ShapeDtypeStruct((n, out_pad), jnp.float32),
        in_specs=[vmem, vmem, vmem],
        out_specs=vmem,
        compiler_params=pltpu.CompilerParams(vmem_limit_bytes=vmem_limit),
    )(x, A, buf)

    penalty_term = []
    return out[:, :out_dim], penalty_term


# --------------------------- pure-JAX reference ----------------------------

def _reference_forward(params, x, A):
    """Direct transcription of the PyTorch module (per-head, un-stacked, exact div)."""
    for (w, b) in params["lin1"]:
        x = _leaky(x @ w + b)
    for (heads, w_cat) in params["gnn"]:
        outs = []
        for (p, a1, a2) in heads:
            HT = A.T
            he = HT @ x
            he = he / jnp.sum(HT, axis=-1, keepdims=True)
            xp = x @ p
            hep = he @ p
            att = xp @ a1 + (hep @ a2).T
            att = jnp.tanh(att / 8.0) * 8.0
            att = _leaky(att)
            H = jnp.exp(att) * A
            H = H / jnp.sum(H, axis=-1, keepdims=True)
            Bd = 1.0 / jnp.sum(H, axis=-2)          # (E,)
            Dd = jnp.sum(H, axis=-1)                # (N,)  (D**-0.5 discarded in ref)
            y = Dd[:, None] * (H @ (Bd[:, None] * (H.T @ (Dd[:, None] * xp))))
            outs.append(_leaky(y))
        x = _leaky(jnp.concatenate(outs, axis=-1) @ w_cat)
    for (w, b) in params["lin2"]:
        x = x @ w + b
    return x


if __name__ == "__main__":
    key = jax.random.PRNGKey(0)
    k_x, k_a, k_p = jax.random.split(key, 3)

    node_size, edge_size = 16, 8
    linear_list1 = [16, 32]
    gnn_list = [32, 32]
    linear_list2 = [32, 8]

    x = jax.random.normal(k_x, (node_size, linear_list1[0]), jnp.float32)

    # incidence matrix: every node in >=1 edge, every edge has >=1 node
    pattern = ((jnp.arange(node_size)[:, None] + jnp.arange(edge_size)[None, :]) % 3) < 2
    rnd = jax.random.bernoulli(k_a, 0.5, (node_size, edge_size))
    A = jnp.logical_or(pattern, rnd).astype(jnp.float32)

    params = init_model(k_p, linear_list1, linear_list2, gnn_list, num_heads=4)

    out, penalty = model_forward(params, x, A)
    out = jax.block_until_ready(out)

    ref = _reference_forward(params, x, A)
    assert out.shape == (node_size, linear_list2[-1])
    assert bool(jnp.all(jnp.isfinite(out)))
    assert penalty == []
    # Slightly looser tolerance than exact-division: kernel uses approximate EUP
    # reciprocals for the three normalisations (per performance guidance).
    assert bool(jnp.allclose(out, ref, rtol=1e-2, atol=1e-3)), float(
        jnp.max(jnp.abs(out - ref)))
    print("KERNEL_OK")
</pallas_src>

<mosaic_0001>
module attributes {stable_mosaic.version = 11 : i64} {
  func.func @_fused_forward_kernel(%arg0: memref<16x16xf32, #tpu.memory_space<vmem>>, %arg1: memref<16x8xf32, #tpu.memory_space<vmem>>, %arg2: memref<472x128xf32, #tpu.memory_space<vmem>>, %arg3: memref<16x128xf32, #tpu.memory_space<vmem>>) attributes {dimension_semantics = [], scalar_prefetch = 0 : i64, scratch_operands = 0 : i64, tpu.core_type = #tpu.core_type<tc>} {
    %c0 = arith.constant 0 : index
    %c0_0 = arith.constant 0 : index
    %0 = vector.load %arg0[%c0, %c0_0] : memref<16x16xf32, #tpu.memory_space<vmem>>, vector<16x16xf32>
    %c0_1 = arith.constant 0 : index
    %c0_2 = arith.constant 0 : index
    %1 = vector.load %arg1[%c0_1, %c0_2] : memref<16x8xf32, #tpu.memory_space<vmem>>, vector<16x8xf32>
    %c0_3 = arith.constant 0 : index
    %c0_4 = arith.constant 0 : index
    %2 = vector.load %arg2[%c0_3, %c0_4] : memref<472x128xf32, #tpu.memory_space<vmem>>, vector<16x32xf32>
    %cst = arith.constant dense<0.000000e+00> : vector<16x32xf32>
    %3 = tpu.matmul %0, %2, %cst {dimension_numbers = #tpu.dot_dimension_numbers<[1], [0], [0], [1], [0, 0, 1, 1], [], []>} : vector<16x16xf32>, vector<16x32xf32>, vector<16x32xf32> -> vector<16x32xf32>
    %c16 = arith.constant 16 : index
    %c0_5 = arith.constant 0 : index
    %4 = vector.load %arg2[%c16, %c0_5] : memref<472x128xf32, #tpu.memory_space<vmem>>, vector<1x32xf32>
    %5 = vector.broadcast %4 : vector<1x32xf32> to vector<16x32xf32>
    %6 = arith.addf %3, %5 : vector<16x32xf32>
    %cst_6 = arith.constant 0.000000e+00 : f32
    %7 = vector.broadcast %cst_6 : f32 to vector<16x32xf32>
    %8 = arith.cmpf ogt, %6, %7 : vector<16x32xf32>
    %cst_7 = arith.constant 1.000000e-01 : f32
    %9 = vector.broadcast %cst_7 : f32 to vector<16x32xf32>
    %10 = arith.mulf %9, %6 : vector<16x32xf32>
    %11 = arith.select %8, %6, %10 : vector<16x32xi1>, vector<16x32xf32>
    %cst_8 = arith.constant 1.000000e+00 : f32
    %12 = vector.broadcast %cst_8 : f32 to vector<16x1xf32>
    %cst_9 = arith.constant dense<0.000000e+00> : vector<1x8xf32>
    %13 = tpu.matmul %12, %1, %cst_9 {dimension_numbers = #tpu.dot_dimension_numbers<[0], [0], [1], [1], [0, 1, 1, 1], [], []>} : vector<16x1xf32>, vector<16x8xf32>, vector<1x8xf32> -> vector<1x8xf32>
    %14 = tpu.reciprocal %13 {approx = true} : vector<1x8xf32> -> vector<1x8xf32>
    %c24 = arith.constant 24 : index
    %c0_10 = arith.constant 0 : index
    %15 = vector.load %arg2[%c24, %c0_10] : memref<472x128xf32, #tpu.memory_space<vmem>>, vector<32x128xf32>
    %c56 = arith.constant 56 : index
    %c0_11 = arith.constant 0 : index
    %16 = vector.load %arg2[%c56, %c0_11] : memref<472x128xf32, #tpu.memory_space<vmem>>, vector<1x128xf32>
    %c64 = arith.constant 64 : index
    %c0_12 = arith.constant 0 : index
    %17 = vector.load %arg2[%c64, %c0_12] : memref<472x128xf32, #tpu.memory_space<vmem>>, vector<32x4xf32>
    %c96 = arith.constant 96 : index
    %c0_13 = arith.constant 0 : index
    %18 = vector.load %arg2[%c96, %c0_13] : memref<472x128xf32, #tpu.memory_space<vmem>>, vector<128x32xf32>
    %c224 = arith.constant 224 : index
    %c0_14 = arith.constant 0 : index
    %19 = vector.load %arg2[%c224, %c0_14] : memref<472x128xf32, #tpu.memory_space<vmem>>, vector<128x32xf32>
    %c352 = arith.constant 352 : index
    %c0_15 = arith.constant 0 : index
    %20 = vector.load %arg2[%c352, %c0_15] : memref<472x128xf32, #tpu.memory_space<vmem>>, vector<4x32xf32>
    %c360 = arith.constant 360 : index
    %c0_16 = arith.constant 0 : index
    %21 = vector.load %arg2[%c360, %c0_16] : memref<472x128xf32, #tpu.memory_space<vmem>>, vector<32x4xf32>
    %c392 = arith.constant 392 : index
    %c0_17 = arith.constant 0 : index
    %22 = vector.load %arg2[%c392, %c0_17] : memref<472x128xf32, #tpu.memory_space<vmem>>, vector<32x128xf32>
    %c424 = arith.constant 424 : index
    %c0_18 = arith.constant 0 : index
    %23 = vector.load %arg2[%c424, %c0_18] : memref<472x128xf32, #tpu.memory_space<vmem>>, vector<8x32xf32>
    %cst_19 = arith.constant dense<0.000000e+00> : vector<16x32xf32>
    %24 = tpu.matmul %1, %23, %cst_19 {dimension_numbers = #tpu.dot_dimension_numbers<[1], [0], [0], [1], [0, 0, 1, 1], [], []>} : vector<16x8xf32>, vector<8x32xf32>, vector<16x32xf32> -> vector<16x32xf32>
    %cst_20 = arith.constant dense<0.000000e+00> : vector<1x32xf32>
    %25 = tpu.matmul %14, %23, %cst_20 {dimension_numbers = #tpu.dot_dimension_numbers<[1], [0], [0], [1], [0, 0, 1, 1], [], []>} : vector<1x8xf32>, vector<8x32xf32>, vector<1x32xf32> -> vector<1x32xf32>
    %cst_21 = arith.constant dense<0.000000e+00> : vector<16x128xf32>
    %26 = tpu.matmul %11, %15, %cst_21 {dimension_numbers = #tpu.dot_dimension_numbers<[1], [0], [0], [1], [0, 0, 1, 1], [], []>} : vector<16x32xf32>, vector<32x128xf32>, vector<16x128xf32> -> vector<16x128xf32>
    %27 = vector.broadcast %16 : vector<1x128xf32> to vector<16x128xf32>
    %28 = arith.mulf %26, %27 : vector<16x128xf32>
    %cst_22 = arith.constant dense<0.000000e+00> : vector<16x32xf32>
    %29 = tpu.matmul %28, %19, %cst_22 {dimension_numbers = #tpu.dot_dimension_numbers<[1], [0], [0], [1], [0, 0, 1, 1], [], []>} : vector<16x128xf32>, vector<128x32xf32>, vector<16x32xf32> -> vector<16x32xf32>
    %cst_23 = arith.constant dense<0.000000e+00> : vector<16x4xf32>
    %30 = tpu.matmul %11, %17, %cst_23 {dimension_numbers = #tpu.dot_dimension_numbers<[1], [0], [0], [1], [0, 0, 1, 1], [], []>} : vector<16x32xf32>, vector<32x4xf32>, vector<16x4xf32> -> vector<16x4xf32>
    %cst_24 = arith.constant dense<0.000000e+00> : vector<16x32xf32>
    %31 = tpu.matmul %30, %20, %cst_24 {dimension_numbers = #tpu.dot_dimension_numbers<[1], [0], [0], [1], [0, 0, 1, 1], [], []>} : vector<16x4xf32>, vector<4x32xf32>, vector<16x32xf32> -> vector<16x32xf32>
    %32 = arith.mulf %31, %24 : vector<16x32xf32>
    %cst_25 = arith.constant dense<0.000000e+00> : vector<1x32xf32>
    %33 = tpu.matmul %12, %32, %cst_25 {dimension_numbers = #tpu.dot_dimension_numbers<[0], [0], [1], [1], [0, 1, 1, 1], [], []>} : vector<16x1xf32>, vector<16x32xf32>, vector<1x32xf32> -> vector<1x32xf32>
    %34 = arith.mulf %33, %25 : vector<1x32xf32>
    %35 = vector.broadcast %34 : vector<1x32xf32> to vector<16x32xf32>
    %36 = arith.addf %29, %35 : vector<16x32xf32>
    %cst_26 = arith.constant 1.250000e-01 : f32
    %37 = vector.broadcast %cst_26 : f32 to vector<16x32xf32>
    %38 = arith.mulf %36, %37 : vector<16x32xf32>
    %39 = math.tanh %38 : vector<16x32xf32>
    %cst_27 = arith.constant 8.000000e+00 : f32
    %40 = vector.broadcast %cst_27 : f32 to vector<16x32xf32>
    %41 = arith.mulf %39, %40 : vector<16x32xf32>
    %cst_28 = arith.constant 0.000000e+00 : f32
    %42 = vector.broadcast %cst_28 : f32 to vector<16x32xf32>
    %43 = arith.cmpf ogt, %41, %42 : vector<16x32xf32>
    %cst_29 = arith.constant 1.000000e-01 : f32
    %44 = vector.broadcast %cst_29 : f32 to vector<16x32xf32>
    %45 = arith.mulf %44, %41 : vector<16x32xf32>
    %46 = arith.select %43, %41, %45 : vector<16x32xi1>, vector<16x32xf32>
    %47 = math.exp %46 : vector<16x32xf32>
    %48 = arith.mulf %47, %24 : vector<16x32xf32>
    %cst_30 = arith.constant dense<0.000000e+00> : vector<16x4xf32>
    %49 = tpu.matmul %48, %21, %cst_30 {dimension_numbers = #tpu.dot_dimension_numbers<[1], [0], [0], [1], [0, 0, 1, 1], [], []>} : vector<16x32xf32>, vector<32x4xf32>, vector<16x4xf32> -> vector<16x4xf32>
    %50 = tpu.reciprocal %49 {approx = true} : vector<16x4xf32> -> vector<16x4xf32>
    %cst_31 = arith.constant dense<0.000000e+00> : vector<16x32xf32>
    %51 = tpu.matmul %50, %20, %cst_31 {dimension_numbers = #tpu.dot_dimension_numbers<[1], [0], [0], [1], [0, 0, 1, 1], [], []>} : vector<16x4xf32>, vector<4x32xf32>, vector<16x32xf32> -> vector<16x32xf32>
    %52 = arith.mulf %48, %51 : vector<16x32xf32>
    %cst_32 = arith.constant dense<0.000000e+00> : vector<32x1xf32>
    %53 = tpu.matmul %52, %12, %cst_32 {dimension_numbers = #tpu.dot_dimension_numbers<[0], [0], [1], [1], [0, 1, 1, 1], [], []>} : vector<16x32xf32>, vector<16x1xf32>, vector<32x1xf32> -> vector<32x1xf32>
    %54 = tpu.reciprocal %53 {approx = true} : vector<32x1xf32> -> vector<32x1xf32>
    %cst_33 = arith.constant dense<0.000000e+00> : vector<32x128xf32>
    %55 = tpu.matmul %52, %26, %cst_33 {dimension_numbers = #tpu.dot_dimension_numbers<[0], [0], [1], [1], [0, 1, 1, 1], [], []>} : vector<16x32xf32>, vector<16x128xf32>, vector<32x128xf32> -> vector<32x128xf32>
    %56 = arith.mulf %55, %22 : vector<32x128xf32>
    %57 = vector.broadcast %54 : vector<32x1xf32> to vector<32x128xf32>
    %58 = arith.mulf %56, %57 : vector<32x128xf32>
    %cst_34 = arith.constant dense<0.000000e+00> : vector<16x128xf32>
    %59 = tpu.matmul %52, %58, %cst_34 {dimension_numbers = #tpu.dot_dimension_numbers<[1], [0], [0], [1], [0, 0, 1, 1], [], []>} : vector<16x32xf32>, vector<32x128xf32>, vector<16x128xf32> -> vector<16x128xf32>
    %cst_35 = arith.constant 0.000000e+00 : f32
    %60 = vector.broadcast %cst_35 : f32 to vector<16x128xf32>
    %61 = arith.cmpf ogt, %59, %60 : vector<16x128xf32>
    %cst_36 = arith.constant 1.000000e-01 : f32
    %62 = vector.broadcast %cst_36 : f32 to vector<16x128xf32>
    %63 = arith.mulf %62, %59 : vector<16x128xf32>
    %64 = arith.select %61, %59, %63 : vector<16x128xi1>, vector<16x128xf32>
    %cst_37 = arith.constant dense<0.000000e+00> : vector<16x32xf32>
    %65 = tpu.matmul %64, %18, %cst_37 {dimension_numbers = #tpu.dot_dimension_numbers<[1], [0], [0], [1], [0, 0, 1, 1], [], []>} : vector<16x128xf32>, vector<128x32xf32>, vector<16x32xf32> -> vector<16x32xf32>
    %cst_38 = arith.constant 0.000000e+00 : f32
    %66 = vector.broadcast %cst_38 : f32 to vector<16x32xf32>
    %67 = arith.cmpf ogt, %65, %66 : vector<16x32xf32>
    %cst_39 = arith.constant 1.000000e-01 : f32
    %68 = vector.broadcast %cst_39 : f32 to vector<16x32xf32>
    %69 = arith.mulf %68, %65 : vector<16x32xf32>
    %70 = arith.select %67, %65, %69 : vector<16x32xi1>, vector<16x32xf32>
    %c432 = arith.constant 432 : index
    %c0_40 = arith.constant 0 : index
    %71 = vector.load %arg2[%c432, %c0_40] : memref<472x128xf32, #tpu.memory_space<vmem>>, vector<32x128xf32>
    %cst_41 = arith.constant dense<0.000000e+00> : vector<16x128xf32>
    %72 = tpu.matmul %70, %71, %cst_41 {dimension_numbers = #tpu.dot_dimension_numbers<[1], [0], [0], [1], [0, 0, 1, 1], [], []>} : vector<16x32xf32>, vector<32x128xf32>, vector<16x128xf32> -> vector<16x128xf32>
    %c464 = arith.constant 464 : index
    %c0_42 = arith.constant 0 : index
    %73 = vector.load %arg2[%c464, %c0_42] : memref<472x128xf32, #tpu.memory_space<vmem>>, vector<1x128xf32>
    %74 = vector.broadcast %73 : vector<1x128xf32> to vector<16x128xf32>
    %75 = arith.addf %72, %74 : vector<16x128xf32>
    %c0_43 = arith.constant 0 : index
    %c0_44 = arith.constant 0 : index
    %76 = vector.load %arg3[%c0_43, %c0_44] : memref<16x128xf32, #tpu.memory_space<vmem>>, vector<16x128xf32>
    tpu.vector_store %arg3[%c0_43, %c0_44], %75 {strides = array<i32>} : memref<16x128xf32, #tpu.memory_space<vmem>>, vector<16x128xf32>,
    return
  }
}

</mosaic_0001>

<llo_original>
// kernel: tpu_custom_call.1
$region0: #{tpu_custom_call.1}
  #allocation0 [shape = 'u32[]', space=smem, size = 0x4, offset = 0x4, fixed_abs, tag = 'smem constant byte address 0x4 - core index']
  #allocation1 [shape = 'u32[72,128]{1,0:T(1,128)}', space=vmem, size = 0x9000, scoped, tag = 'internal scratch']
  %s0 = inlined_call_operand.vmem [shape: f32[16,16], index: 0, kind: input, shape index: {}]
  %s1 = inlined_call_operand.vmem [shape: f32[16,8], index: 1, kind: input, shape index: {}]
  %s2 = inlined_call_operand.hbm [shape: f32[472,128], index: 2, kind: input, shape index: {}]
  %s3 = inlined_call_operand.hbm [shape: f32[16,128], index: 3, kind: output, shape index: {}]
  %s4 = sld [smem:[#allocation0]]
  $region26: #{tpu_custom_call.1} parent=0
    _
  %s6 = ssub.s32 1, %s4
  %s7 = scalar_select 0, %s6, %s4
  $region1: #{tpu_custom_call.1} parent=0
    #allocation2 [shape = 'u8[241664]{0}', space=vmem, size = 0x3b000, scoped, tag = 'input window, operand 2, single buffered']
    #allocation3 [shape = 's32[1]{0}', space=sflag, size = 0x4, scoped, tag = 'scoped memory for tpu_custom_call.1']
    #allocation4 [shape = 's32[1]{0}', space=sflag, size = 0x4, scoped, tag = 'scoped memory for tpu_custom_call.1']
    #allocation5 [shape = 'u8[8192]{0}', space=vmem, size = 0x2000, scoped, tag = 'output window, operand 0, single buffered']
    %8 = vsyncpa [#allocation3], 0
    %9 = vsyncpa [#allocation4], 0
    // Predicated region
    $region2: #{tpu_custom_call.1} parent=1 // pred_check
      _
    $region3: #{tpu_custom_call.1} parent=1 // pred_check_branch
      %11 = sbr.rel (0) target = $region5
    $region4: #{tpu_custom_call.1} parent=1 // pred_region
      _
    $region5: #{tpu_custom_call.1} parent=1 // pred_fallthru
      _
    // Predicated region
    $region6: #{tpu_custom_call.1} parent=1 // pred_check
      _
    $region7: #{tpu_custom_call.1} parent=1 // pred_check_branch
      %13 = sbr.rel (0) target = $region9
    $region8: #{tpu_custom_call.1} parent=1 // pred_region
      _
    $region9: #{tpu_custom_call.1} parent=1 // pred_fallthru
      _
    // Predicated region
    $region10: #{tpu_custom_call.1} parent=1 // pred_check
      _
    $region11: #{tpu_custom_call.1} parent=1 // pred_check_branch
      %15 = sbr.rel (0) target = $region13
    $region12: #{tpu_custom_call.1} parent=1 // pred_region
      %17 = vsyncadd [#allocation3], 0
      %s18 = sshll.u32 %s2, 4
      %s19 = int_to_ptr.hbm [resolvable:$true] %s18
      %s20 = sshll.u32 [#allocation2], 4
      %s21 = int_to_ptr.vmem [resolvable:$true] %s20
      %26 = dma.hbm_to_vmem [thread:$0]  %s19, 7552, %s21, [#allocation3], 128, 128, 8
    $region13: #{tpu_custom_call.1} parent=1 // pred_fallthru
      _
    // Predicated region
    $region14: #{tpu_custom_call.1} parent=1 // pred_check
      _
    $region15: #{tpu_custom_call.1} parent=1 // pred_check_branch
      %28 = sbr.rel (0) target = $region17
    $region16: #{tpu_custom_call.1} parent=1 // pred_region
      %30 = dma.done [#allocation3], 7552
    $region17: #{tpu_custom_call.1} parent=1 // pred_fallthru
      _
    %v31 = vld [vmem:[%s0] sm:$0xff]
    %v32 = vld [vmem:[%s0 + $0x8] sm:$0xff]
    %v33 = vld [vmem:[%s1] sm:$0xff]
    %v34 = vld [vmem:[%s1 + $0x8] sm:$0xff]
    %v35 = vld [vmem:[#allocation2] sm:$0xff]
    %v36 = vld [vmem:[#allocation2 + $0x8] sm:$0xff]
    %v37 = vld [vmem:[#allocation2 + $0x10] sm:$0x1]
    %v38 = vperm.slane %v37, 0
    %vm39 = vcmask 130048
    %v41 = vsel %vm39, %v31, 0
    %v44 = vsel %vm39, %v32, 0
    %46 = vmatpush.msra.mxu0 0.0
    %47 = vmatpush.msra.mxu0 0.0
    %48 = vmatpush.msra.mxu0 0.0
    %49 = vmatpush.msra.mxu0 0.0
    %50 = vmatpush.msra.mxu0 0.0
    %51 = vmatpush.msra.mxu0 0.0
    %52 = vmatpush.msra.mxu0 0.0
    %53 = vmatpush.msra.mxu0 0.0
    %54 = vmatpush.msra.mxu0 0.0
    %55 = vmatpush.msra.mxu0 0.0
    %56 = vmatpush.msra.mxu0 0.0
    %57 = vmatpush.msra.mxu0 0.0
    %58 = vmatpush.msra.mxu0 0.0
    %59 = vmatpush.msra.mxu0 0.0
    %60 = vmatpush.msra.mxu0 %v36
    %61 = vmatpush.msra.mxu0 %v35
    %62 = vmatmul.f32.gmra.mxu0 %v41
    %v63 = vpop.f32.mrf.mxu0
    %v64 = vadd.f32 %v38, %v63
    %65 = vmatmul.f32.gmra.mxu0 %v44
    %v66 = vpop.f32.mrf.mxu0
    %v67 = vadd.f32 %v38, %v66
    %68 = vdwg.mxu0
    %vm69 = vcmp.gt.f32.partialorder %v64, 0.0
    %vm70 = vcmp.gt.f32.partialorder %v67, 0.0
    %v71 = vmul.f32 %v64, 0.1
    %v72 = vmul.f32 %v67, 0.1
    %v73 = vsel %vm69, %v64, %v71
    %v74 = vsel %vm70, %v67, %v72
    %75 = vxpose.xlu0.b32.start [1/16] 1.0, 128
    %76 = vxpose.xlu0.b32.cont [2/16] 1.0, 128
    %77 = vxpose.xlu0.b32.cont [3/16] 0.0, 128
    %78 = vxpose.xlu0.b32.cont [4/16] 0.0, 128
    %79 = vxpose.xlu0.b32.cont [5/16] 0.0, 128
    %80 = vxpose.xlu0.b32.cont [6/16] 0.0, 128
    %81 = vxpose.xlu0.b32.cont [7/16] 0.0, 128
    %82 = vxpose.xlu0.b32.cont [8/16] 0.0, 128
    %83 = vxpose.xlu0.b32.cont [9/16] 0.0, 128
    %84 = vxpose.xlu0.b32.cont [10/16] 0.0, 128
    %85 = vxpose.xlu0.b32.cont [11/16] 0.0, 128
    %86 = vxpose.xlu0.b32.cont [12/16] 0.0, 128
    %87 = vxpose.xlu0.b32.cont [13/16] 0.0, 128
    %88 = vxpose.xlu0.b32.cont [14/16] 0.0, 128
    %89 = vxpose.xlu0.b32.cont [15/16] 0.0, 128
    %90 = vxpose.xlu0.b32.end [16/16] 0.0, 128
    %v91 = vpop.trf.xlu0
    %v92 = vpop.trf.xlu0
    %v93 = vpop.trf.xlu0
    %v94 = vpop.trf.xlu0
    %v95 = vpop.trf.xlu0
    %v96 = vpop.trf.xlu0
    %v97 = vpop.trf.xlu0
    %v98 = vpop.trf.xlu0
    %v99 = vpop.trf.xlu0
    %v100 = vpop.trf.xlu0
    %v101 = vpop.trf.xlu0
    %v102 = vpop.trf.xlu0
    %v103 = vpop.trf.xlu0
    %v104 = vpop.trf.xlu0
    %v105 = vpop.trf.xlu0
    %v106 = vpop.trf.xlu0
    %v108 = vsel %vm39, %v91, 0
    %110 = vmatpush.msra.mxu0 0.0
    %111 = vmatpush.msra.mxu0 0.0
    %112 = vmatpush.msra.mxu0 0.0
    %113 = vmatpush.msra.mxu0 0.0
    %114 = vmatpush.msra.mxu0 0.0
    %115 = vmatpush.msra.mxu0 0.0
    %116 = vmatpush.msra.mxu0 0.0
    %117 = vmatpush.msra.mxu0 0.0
    %118 = vmatpush.msra.mxu0 0.0
    %119 = vmatpush.msra.mxu0 0.0
    %120 = vmatpush.msra.mxu0 0.0
    %121 = vmatpush.msra.mxu0 0.0
    %122 = vmatpush.msra.mxu0 0.0
    %123 = vmatpush.msra.mxu0 0.0
    %124 = vmatpush.msra.mxu0 %v34
    %125 = vmatpush.msra.mxu0 %v33
    %126 = vmatmul.f32.gmra.mxu0 %v108
    %v127 = vpop.f32.mrf.mxu0
    %v128 = vadd.f32 0.0, %v127
    %129 = vdwg.mxu0
    %v130 = vrcp.pop %v128
    %v131 = vld [vmem:[#allocation2 + $0x18] sm:$0xff]
    %v132 = vld [vmem:[#allocation2 + $0x20] sm:$0xff]
    %v133 = vld [vmem:[#allocation2 + $0x28] sm:$0xff]
    %v134 = vld [vmem:[#allocation2 + $0x30] sm:$0xff]
    %v135 = vld [vmem:[#allocation2 + $0x38] sm:$0x1]
    %v136 = vld [vmem:[#allocation2 + $0x40] sm:$0xff]
    %v137 = vld [vmem:[#allocation2 + $0x48] sm:$0xff]
    %v138 = vld [vmem:[#allocation2 + $0x50] sm:$0xff]
    %v139 = vld [vmem:[#allocation2 + $0x58] sm:$0xff]
    %v140 = vld [vmem:[#allocation2 + $0x60] sm:$0xff]
    %v141 = vld [vmem:[#allocation2 + $0x68] sm:$0xff]
    %v142 = vld [vmem:[#allocation2 + $0x70] sm:$0xff]
    %v143 = vld [vmem:[#allocation2 + $0x78] sm:$0xff]
    %v144 = vld [vmem:[#allocation2 + $0x80] sm:$0xff]
    %v145 = vld [vmem:[#allocation2 + $0x88] sm:$0xff]
    %v146 = vld [vmem:[#allocation2 + $0x90] sm:$0xff]
    %v147 = vld [vmem:[#allocation2 + $0x98] sm:$0xff]
    %v148 = vld [vmem:[#allocation2 + $0xa0] sm:$0xff]
    %v149 = vld [vmem:[#allocation2 + $0xa8] sm:$0xff]
    %v150 = vld [vmem:[#allocation2 + $0xb0] sm:$0xff]
    %v151 = vld [vmem:[#allocation2 + $0xb8] sm:$0xff]
    %v152 = vld [vmem:[#allocation2 + $0xc0] sm:$0xff]
    %v153 = vld [vmem:[#allocation2 + $0xc8] sm:$0xff]
    %v154 = vld [vmem:[#allocation2 + $0xd0] sm:$0xff]
    %v155 = vld [vmem:[#allocation2 + $0xd8] sm:$0xff]
    %v156 = vld [vmem:[#allocation2 + $0xe0] sm:$0xff]
    %v157 = vld [vmem:[#allocation2 + $0xe8] sm:$0xff]
    %v158 = vld [vmem:[#allocation2 + $0xf0] sm:$0xff]
    %v159 = vld [vmem:[#allocation2 + $0xf8] sm:$0xff]
    %v160 = vld [vmem:[#allocation2 + $0x100] sm:$0xff]
    %v161 = vld [vmem:[#allocation2 + $0x108] sm:$0xff]
    %v162 = vld [vmem:[#allocation2 + $0x110] sm:$0xff]
    %v163 = vld [vmem:[#allocation2 + $0x118] sm:$0xff]
    %v164 = vld [vmem:[#allocation2 + $0x120] sm:$0xff]
    %v165 = vld [vmem:[#allocation2 + $0x128] sm:$0xff]
    %v166 = vld [vmem:[#allocation2 + $0x130] sm:$0xff]
    %v167 = vld [vmem:[#allocation2 + $0x138] sm:$0xff]
    %v168 = vld [vmem:[#allocation2 + $0x140] sm:$0xff]
    %v169 = vld [vmem:[#allocation2 + $0x148] sm:$0xff]
    %v170 = vld [vmem:[#allocation2 + $0x150] sm:$0xff]
    %v171 = vld [vmem:[#allocation2 + $0x158] sm:$0xff]
    %v172 = vld [vmem:[#allocation2 + $0x160] sm:$0xf]
    %v173 = vld [vmem:[#allocation2 + $0x168] sm:$0xff]
    %v174 = vld [vmem:[#allocation2 + $0x170] sm:$0xff]
    %v175 = vld [vmem:[#allocation2 + $0x178] sm:$0xff]
    %v176 = vld [vmem:[#allocation2 + $0x180] sm:$0xff]
    %v177 = vld [vmem:[#allocation2 + $0x188] sm:$0xff]
    %v178 = vld [vmem:[#allocation2 + $0x190] sm:$0xff]
    %v179 = vld [vmem:[#allocation2 + $0x198] sm:$0xff]
    %v180 = vld [vmem:[#allocation2 + $0x1a0] sm:$0xff]
    %v181 = vld [vmem:[#allocation2 + $0x1a8] sm:$0xff]
    %vm182 = vcmask 64512
    %v184 = vsel %vm182, %v33, 0
    %v187 = vsel %vm182, %v34, 0
    %189 = vmatpush.msra.mxu0 0.0
    %190 = vmatpush.msra.mxu0 0.0
    %191 = vmatpush.msra.mxu0 0.0
    %192 = vmatpush.msra.mxu0 0.0
    %193 = vmatpush.msra.mxu0 0.0
    %194 = vmatpush.msra.mxu0 0.0
    %195 = vmatpush.msra.mxu0 0.0
    %196 = vmatpush.msra.mxu0 0.0
    %197 = vmatpush.msra.mxu0 0.0
    %198 = vmatpush.msra.mxu0 0.0
    %199 = vmatpush.msra.mxu0 0.0
    %200 = vmatpush.msra.mxu0 0.0
    %201 = vmatpush.msra.mxu0 0.0
    %202 = vmatpush.msra.mxu0 0.0
    %203 = vmatpush.msra.mxu0 0.0
    %204 = vmatpush.msra.mxu0 %v181
    %205 = vmatmul.f32.gmra.mxu0 %v184
    %v206 = vpop.f32.mrf.mxu0
    %v207 = vadd.f32 0.0, %v206
    %208 = vmatmul.f32.gmra.mxu0 %v187
    %v209 = vpop.f32.mrf.mxu0
    %v210 = vadd.f32 0.0, %v209
    %211 = vdwg.mxu0
    %v213 = vsel %vm182, %v130, 0
    %215 = vmatpush.msra.mxu0 0.0
    %216 = vmatpush.msra.mxu0 0.0
    %217 = vmatpush.msra.mxu0 0.0
    %218 = vmatpush.msra.mxu0 0.0
    %219 = vmatpush.msra.mxu0 0.0
    %220 = vmatpush.msra.mxu0 0.0
    %221 = vmatpush.msra.mxu0 0.0
    %222 = vmatpush.msra.mxu0 0.0
    %223 = vmatpush.msra.mxu0 0.0
    %224 = vmatpush.msra.mxu0 0.0
    %225 = vmatpush.msra.mxu0 0.0
    %226 = vmatpush.msra.mxu0 0.0
    %227 = vmatpush.msra.mxu0 0.0
    %228 = vmatpush.msra.mxu0 0.0
    %229 = vmatpush.msra.mxu0 0.0
    %230 = vmatpush.msra.mxu0 %v181
    %231 = vmatmul.f32.gmra.mxu0 %v213
    %v232 = vpop.f32.mrf.mxu0
    %v233 = vadd.f32 0.0, %v232
    %234 = vdwg.mxu0
    %vm235 = vcmask 261120
    %v237 = vsel %vm235, %v73, 0
    %v240 = vsel %vm235, %v74, 0
    %242 = vmatpush.msra.mxu0 0.0
    %243 = vmatpush.msra.mxu0 0.0
    %244 = vmatpush.msra.mxu0 0.0
    %245 = vmatpush.msra.mxu0 0.0
    %246 = vmatpush.msra.mxu0 0.0
    %247 = vmatpush.msra.mxu0 0.0
    %248 = vmatpush.msra.mxu0 0.0
    %249 = vmatpush.msra.mxu0 0.0
    %250 = vmatpush.msra.mxu0 0.0
    %251 = vmatpush.msra.mxu0 0.0
    %252 = vmatpush.msra.mxu0 0.0
    %253 = vmatpush.msra.mxu0 0.0
    %254 = vmatpush.msra.mxu0 %v134
    %255 = vmatpush.msra.mxu0 %v133
    %256 = vmatpush.msra.mxu0 %v132
    %257 = vmatpush.msra.mxu0 %v131
    %258 = vmatmul.f32.gmra.mxu0 %v237
    %v259 = vpop.f32.mrf.mxu0
    %v260 = vadd.f32 0.0, %v259
    %261 = vmatmul.f32.gmra.mxu0 %v240
    %v262 = vpop.f32.mrf.mxu0
    %v263 = vadd.f32 0.0, %v262
    %264 = vdwg.mxu0
    %v265 = vperm.slane %v135, 0
    %v266 = vmul.f32 %v260, %v265
    %v267 = vmul.f32 %v263, %v265
    %268 = vmatpush.msra.mxu0 0.0
    %269 = vmatpush.msra.mxu0 0.0
    %270 = vmatpush.msra.mxu0 0.0
    %271 = vmatpush.msra.mxu0 0.0
    %272 = vmatpush.msra.mxu0 0.0
    %273 = vmatpush.msra.mxu0 0.0
    %274 = vmatpush.msra.mxu0 0.0
    %275 = vmatpush.msra.mxu0 0.0
    %276 = vmatpush.msra.mxu0 0.0
    %277 = vmatpush.msra.mxu0 0.0
    %278 = vmatpush.msra.mxu0 0.0
    %279 = vmatpush.msra.mxu0 0.0
    %280 = vmatpush.msra.mxu0 %v139
    %281 = vmatpush.msra.mxu0 %v138
    %282 = vmatpush.msra.mxu0 %v137
    %283 = vmatpush.msra.mxu0 %v136
    %284 = vmatmul.f32.gmra.mxu0 %v237
    %v285 = vpop.f32.mrf.mxu0
    %v286 = vadd.f32 0.0, %v285
    %287 = vmatmul.f32.gmra.mxu0 %v240
    %v288 = vpop.f32.mrf.mxu0
    %v289 = vadd.f32 0.0, %v288
    %290 = vdwg.mxu0
    %vm291 = vcmask 31744
    %v293 = vsel %vm291, %v286, 0
    %v296 = vsel %vm291, %v289, 0
    %vm298 = vcmask 1043456
    %v300 = vsel %vm298, %v172, 0
    %302 = vmatpush.msra.mxu0 0.0
    %303 = vmatpush.msra.mxu0 0.0
    %304 = vmatpush.msra.mxu0 0.0
    %305 = vmatpush.msra.mxu0 0.0
    %306 = vmatpush.msra.mxu0 0.0
    %307 = vmatpush.msra.mxu0 0.0
    %308 = vmatpush.msra.mxu0 0.0
    %309 = vmatpush.msra.mxu0 0.0
    %310 = vmatpush.msra.mxu0 0.0
    %311 = vmatpush.msra.mxu0 0.0
    %312 = vmatpush.msra.mxu0 0.0
    %313 = vmatpush.msra.mxu0 0.0
    %314 = vmatpush.msra.mxu0 0.0
    %315 = vmatpush.msra.mxu0 0.0
    %316 = vmatpush.msra.mxu0 0.0
    %317 = vmatpush.msra.mxu0 %v300
    %318 = vmatmul.f32.gmra.mxu0 %v293
    %v319 = vpop.f32.mrf.mxu0
    %v320 = vadd.f32 0.0, %v319
    %321 = vmatmul.f32.gmra.mxu0 %v296
    %v322 = vpop.f32.mrf.mxu0
    %v323 = vadd.f32 0.0, %v322
    %324 = vdwg.mxu0
    %v325 = vmul.f32 %v320, %v207
    %v326 = vmul.f32 %v323, %v210
    %327 = vmatpush.msra.mxu0 0.0
    %328 = vmatpush.msra.mxu0 0.0
    %329 = vmatpush.msra.mxu0 0.0
    %330 = vmatpush.msra.mxu0 0.0
    %331 = vmatpush.msra.mxu0 0.0
    %332 = vmatpush.msra.mxu0 0.0
    %333 = vmatpush.msra.mxu0 0.0
    %334 = vmatpush.msra.mxu0 0.0
    %335 = vmatpush.msra.mxu0 0.0
    %336 = vmatpush.msra.mxu0 0.0
    %337 = vmatpush.msra.mxu0 0.0
    %338 = vmatpush.msra.mxu0 0.0
    %339 = vmatpush.msra.mxu0 0.0
    %340 = vmatpush.msra.mxu0 0.0
    %341 = vmatpush.msra.mxu0 %v326
    %342 = vmatpush.msra.mxu0 %v325
    %343 = vmatmul.f32.gmra.mxu0 %v108
    %v344 = vpop.f32.mrf.mxu0
    %v345 = vadd.f32 0.0, %v344
    %346 = vdwg.mxu0
    %v347 = vmul.f32 %v345, %v233
    %v348 = vperm.slane %v347, 0
    %349 = vmatpush.msra.mxu0 %v171
    %350 = vmatpush.msra.mxu0 %v170
    %351 = vmatpush.msra.mxu0 %v169
    %352 = vmatpush.msra.mxu0 %v168
    %353 = vmatpush.msra.mxu0 %v167
    %354 = vmatpush.msra.mxu0 %v166
    %355 = vmatpush.msra.mxu0 %v165
    %356 = vmatpush.msra.mxu0 %v164
    %357 = vmatpush.msra.mxu0 %v163
    %358 = vmatpush.msra.mxu0 %v162
    %359 = vmatpush.msra.mxu0 %v161
    %360 = vmatpush.msra.mxu0 %v160
    %361 = vmatpush.msra.mxu0 %v159
    %362 = vmatpush.msra.mxu0 %v158
    %363 = vmatpush.msra.mxu0 %v157
    %364 = vmatpush.msra.mxu0 %v156
    %365 = vmatmul.f32.gmra.mxu0 %v266
    %v366 = vpop.f32.mrf.mxu0
    %v367 = vadd.f32 %v348, %v366
    %368 = vmatmul.f32.gmra.mxu0 %v267
    %v369 = vpop.f32.mrf.mxu0
    %v370 = vadd.f32 %v348, %v369
    %371 = vdwg.mxu0
    %v372 = vmul.f32 %v367, 0.125
    %v373 = vmul.f32 %v370, 0.125
    %v374 = vtanh.pop %v372
    %v375 = vtanh.pop %v373
    %v376 = vmul.f32 %v374, 8.0
    %v377 = vmul.f32 %v375, 8.0
    %vm378 = vcmp.gt.f32.partialorder %v376, 0.0
    %vm379 = vcmp.gt.f32.partialorder %v377, 0.0
    %v380 = vmul.f32 %v376, 0.1
    %v381 = vmul.f32 %v377, 0.1
    %v382 = vsel %vm378, %v376, %v380
    %v383 = vsel %vm379, %v377, %v381
    %v384 = vmul.f32 %v382, 1.442695
    %v385 = vpow.pop %v384
    %v386 = vmul.f32 %v383, 1.442695
    %v387 = vpow.pop %v386
    %v388 = vmul.f32 %v385, %v207
    %v389 = vmul.f32 %v387, %v210
    %v391 = vsel %vm235, %v388, 0
    %v394 = vsel %vm235, %v389, 0
    %396 = vmatpush.msra.mxu0 0.0
    %397 = vmatpush.msra.mxu0 0.0
    %398 = vmatpush.msra.mxu0 0.0
    %399 = vmatpush.msra.mxu0 0.0
    %400 = vmatpush.msra.mxu0 0.0
    %401 = vmatpush.msra.mxu0 0.0
    %402 = vmatpush.msra.mxu0 0.0
    %403 = vmatpush.msra.mxu0 0.0
    %404 = vmatpush.msra.mxu0 0.0
    %405 = vmatpush.msra.mxu0 0.0
    %406 = vmatpush.msra.mxu0 0.0
    %407 = vmatpush.msra.mxu0 0.0
    %408 = vmatpush.msra.mxu0 %v176
    %409 = vmatpush.msra.mxu0 %v175
    %410 = vmatpush.msra.mxu0 %v174
    %411 = vmatpush.msra.mxu0 %v173
    %412 = vmatmul.f32.gmra.mxu0 %v391
    %v413 = vpop.f32.mrf.mxu0
    %v414 = vadd.f32 0.0, %v413
    %415 = vmatmul.f32.gmra.mxu0 %v394
    %v416 = vpop.f32.mrf.mxu0
    %v417 = vadd.f32 0.0, %v416
    %418 = vdwg.mxu0
    %v419 = vrcp.pop %v414
    %v420 = vrcp.pop %v417
    %v422 = vsel %vm291, %v419, 0
    %v425 = vsel %vm291, %v420, 0
    %427 = vmatpush.msra.mxu0 0.0
    %428 = vmatpush.msra.mxu0 0.0
    %429 = vmatpush.msra.mxu0 0.0
    %430 = vmatpush.msra.mxu0 0.0
    %431 = vmatpush.msra.mxu0 0.0
    %432 = vmatpush.msra.mxu0 0.0
    %433 = vmatpush.msra.mxu0 0.0
    %434 = vmatpush.msra.mxu0 0.0
    %435 = vmatpush.msra.mxu0 0.0
    %436 = vmatpush.msra.mxu0 0.0
    %437 = vmatpush.msra.mxu0 0.0
    %438 = vmatpush.msra.mxu0 0.0
    %439 = vmatpush.msra.mxu0 0.0
    %440 = vmatpush.msra.mxu0 0.0
    %441 = vmatpush.msra.mxu0 0.0
    %442 = vmatpush.msra.mxu0 %v300
    %443 = vmatmul.f32.gmra.mxu0 %v422
    %v444 = vpop.f32.mrf.mxu0
    %v445 = vadd.f32 0.0, %v444
    %446 = vmatmul.f32.gmra.mxu0 %v425
    %v447 = vpop.f32.mrf.mxu0
    %v448 = vadd.f32 0.0, %v447
    %449 = vdwg.mxu0
    %v450 = vmul.f32 %v388, %v445
    %v451 = vmul.f32 %v389, %v448
    %452 = vxpose.xlu0.b32.start [1/16] %v450, 128
    %453 = vxpose.xlu0.b32.cont [2/16] %v451, 128
    %454 = vxpose.xlu0.b32.cont [3/16] 0.0, 128
    %455 = vxpose.xlu0.b32.cont [4/16] 0.0, 128
    %456 = vxpose.xlu0.b32.cont [5/16] 0.0, 128
    %457 = vxpose.xlu0.b32.cont [6/16] 0.0, 128
    %458 = vxpose.xlu0.b32.cont [7/16] 0.0, 128
    %459 = vxpose.xlu0.b32.cont [8/16] 0.0, 128
    %460 = vxpose.xlu0.b32.cont [9/16] 0.0, 128
    %461 = vxpose.xlu0.b32.cont [10/16] 0.0, 128
    %462 = vxpose.xlu0.b32.cont [11/16] 0.0, 128
    %463 = vxpose.xlu0.b32.cont [12/16] 0.0, 128
    %464 = vxpose.xlu0.b32.cont [13/16] 0.0, 128
    %465 = vxpose.xlu0.b32.cont [14/16] 0.0, 128
    %466 = vxpose.xlu0.b32.cont [15/16] 0.0, 128
    %467 = vxpose.xlu0.b32.end [16/16] 0.0, 128
    %v468 = vpop.trf.xlu0
    %v469 = vpop.trf.xlu0
    %v470 = vpop.trf.xlu0
    %v471 = vpop.trf.xlu0
    %v472 = vpop.trf.xlu0
    %v473 = vpop.trf.xlu0
    %v474 = vpop.trf.xlu0
    %v475 = vpop.trf.xlu0
    %v476 = vpop.trf.xlu0
    %v477 = vpop.trf.xlu0
    %v478 = vpop.trf.xlu0
    %v479 = vpop.trf.xlu0
    %v480 = vpop.trf.xlu0
    %v481 = vpop.trf.xlu0
    %v482 = vpop.trf.xlu0
    %v483 = vpop.trf.xlu0
    %v485 = vsel %vm39, %v468, 0
    %v488 = vsel %vm39, %v469, 0
    %v491 = vsel %vm39, %v470, 0
    %v494 = vsel %vm39, %v471, 0
    %496 = vmatpush.msra.mxu0 0.0
    %497 = vmatpush.msra.mxu0 0.0
    %498 = vmatpush.msra.mxu0 0.0
    %499 = vmatpush.msra.mxu0 0.0
    %500 = vmatpush.msra.mxu0 0.0
    %501 = vmatpush.msra.mxu0 0.0
    %502 = vmatpush.msra.mxu0 0.0
    %503 = vmatpush.msra.mxu0 0.0
    %504 = vmatpush.msra.mxu0 0.0
    %505 = vmatpush.msra.mxu0 0.0
    %506 = vmatpush.msra.mxu0 0.0
    %507 = vmatpush.msra.mxu0 0.0
    %508 = vmatpush.msra.mxu0 0.0
    %509 = vmatpush.msra.mxu0 0.0
    %510 = vmatpush.msra.mxu0 1.0
    %511 = vmatpush.msra.mxu0 1.0
    %512 = vmatmul.f32.gmra.mxu0 %v485
    %v513 = vpop.f32.mrf.mxu0
    %v514 = vadd.f32 0.0, %v513
    %515 = vmatmul.f32.gmra.mxu0 %v488
    %v516 = vpop.f32.mrf.mxu0
    %v517 = vadd.f32 0.0, %v516
    %518 = vmatmul.f32.gmra.mxu0 %v491
    %v519 = vpop.f32.mrf.mxu0
    %v520 = vadd.f32 0.0, %v519
    %521 = vmatmul.f32.gmra.mxu0 %v494
    %v522 = vpop.f32.mrf.mxu0
    %v523 = vadd.f32 0.0, %v522
    %524 = vdwg.mxu0
    %v525 = vrcp.pop %v514
    %v526 = vrcp.pop %v517
    %v527 = vrcp.pop %v520
    %v528 = vrcp.pop %v523
    %529 = vmatpush.msra.mxu0 0.0
    %530 = vmatpush.msra.mxu0 0.0
    %531 = vmatpush.msra.mxu0 0.0
    %532 = vmatpush.msra.mxu0 0.0
    %533 = vmatpush.msra.mxu0 0.0
    %534 = vmatpush.msra.mxu0 0.0
    %535 = vmatpush.msra.mxu0 0.0
    %536 = vmatpush.msra.mxu0 0.0
    %537 = vmatpush.msra.mxu0 0.0
    %538 = vmatpush.msra.mxu0 0.0
    %539 = vmatpush.msra.mxu0 0.0
    %540 = vmatpush.msra.mxu0 0.0
    %541 = vmatpush.msra.mxu0 0.0
    %542 = vmatpush.msra.mxu0 0.0
    %543 = vmatpush.msra.mxu0 %v263
    %544 = vmatpush.msra.mxu0 %v260
    %545 = vmatmul.f32.gmra.mxu0 %v485
    %v546 = vpop.f32.mrf.mxu0
    %v547 = vadd.f32 0.0, %v546
    %548 = vmatmul.f32.gmra.mxu0 %v488
    %v549 = vpop.f32.mrf.mxu0
    %v550 = vadd.f32 0.0, %v549
    %551 = vmatmul.f32.gmra.mxu0 %v491
    %v552 = vpop.f32.mrf.mxu0
    %v553 = vadd.f32 0.0, %v552
    %554 = vmatmul.f32.gmra.mxu0 %v494
    %v555 = vpop.f32.mrf.mxu0
    %v556 = vadd.f32 0.0, %v555
    %557 = vdwg.mxu0
    %v558 = vmul.f32 %v547, %v177
    %v559 = vmul.f32 %v550, %v178
    %v560 = vmul.f32 %v553, %v179
    %v561 = vmul.f32 %v556, %v180
    %563 = vset.pattern.permute.xlu0 0
    %564 = vperm.xlu0 %563, %v525
    %v565 = vpop.permute.xlu0 %564
    %568 = vset.pattern.permute.xlu0 0
    %569 = vperm.xlu0 %568, %v526
    %v570 = vpop.permute.xlu0 %569
    %573 = vset.pattern.permute.xlu0 0
    %574 = vperm.xlu0 %573, %v527
    %v575 = vpop.permute.xlu0 %574
    %578 = vset.pattern.permute.xlu0 0
    %579 = vperm.xlu0 %578, %v528
    %v580 = vpop.permute.xlu0 %579
    %v582 = vmul.f32 %v558, %v565
    %v583 = vmul.f32 %v559, %v570
    %v584 = vmul.f32 %v560, %v575
    %v585 = vmul.f32 %v561, %v580
    %v587 = vsel %vm235, %v450, 0
    %v590 = vsel %vm235, %v451, 0
    %592 = vmatpush.msra.mxu0 0.0
    %593 = vmatpush.msra.mxu0 0.0
    %594 = vmatpush.msra.mxu0 0.0
    %595 = vmatpush.msra.mxu0 0.0
    %596 = vmatpush.msra.mxu0 0.0
    %597 = vmatpush.msra.mxu0 0.0
    %598 = vmatpush.msra.mxu0 0.0
    %599 = vmatpush.msra.mxu0 0.0
    %600 = vmatpush.msra.mxu0 0.0
    %601 = vmatpush.msra.mxu0 0.0
    %602 = vmatpush.msra.mxu0 0.0
    %603 = vmatpush.msra.mxu0 0.0
    %604 = vmatpush.msra.mxu0 %v585
    %605 = vmatpush.msra.mxu0 %v584
    %606 = vmatpush.msra.mxu0 %v583
    %607 = vmatpush.msra.mxu0 %v582
    %608 = vmatmul.f32.gmra.mxu0 %v587
    %v609 = vpop.f32.mrf.mxu0
    %v610 = vadd.f32 0.0, %v609
    %611 = vmatmul.f32.gmra.mxu0 %v590
    %v612 = vpop.f32.mrf.mxu0
    %v613 = vadd.f32 0.0, %v612
    %614 = vdwg.mxu0
    %vm615 = vcmp.gt.f32.partialorder %v610, 0.0
    %vm616 = vcmp.gt.f32.partialorder %v613, 0.0
    %v617 = vmul.f32 %v610, 0.1
    %v618 = vmul.f32 %v613, 0.1
    %v619 = vsel %vm615, %v610, %v617
    %v620 = vsel %vm616, %v613, %v618
    %621 = vmatpush.msra.mxu0 %v155
    %622 = vmatpush.msra.mxu0 %v154
    %623 = vmatpush.msra.mxu0 %v153
    %624 = vmatpush.msra.mxu0 %v152
    %625 = vmatpush.msra.mxu0 %v151
    %626 = vmatpush.msra.mxu0 %v150
    %627 = vmatpush.msra.mxu0 %v149
    %628 = vmatpush.msra.mxu0 %v148
    %629 = vmatpush.msra.mxu0 %v147
    %630 = vmatpush.msra.mxu0 %v146
    %631 = vmatpush.msra.mxu0 %v145
    %632 = vmatpush.msra.mxu0 %v144
    %633 = vmatpush.msra.mxu0 %v143
    %634 = vmatpush.msra.mxu0 %v142
    %635 = vmatpush.msra.mxu0 %v141
    %636 = vmatpush.msra.mxu0 %v140
    %637 = vmatmul.f32.gmra.mxu0 %v619
    %v638 = vpop.f32.mrf.mxu0
    %v639 = vadd.f32 0.0, %v638
    %640 = vmatmul.f32.gmra.mxu0 %v620
    %v641 = vpop.f32.mrf.mxu0
    %v642 = vadd.f32 0.0, %v641
    %643 = vdwg.mxu0
    %vm644 = vcmp.gt.f32.partialorder %v639, 0.0
    %vm645 = vcmp.gt.f32.partialorder %v642, 0.0
    %v646 = vmul.f32 %v639, 0.1
    %v647 = vmul.f32 %v642, 0.1
    %v648 = vsel %vm644, %v639, %v646
    %v649 = vsel %vm645, %v642, %v647
    %v650 = vld [vmem:[#allocation2 + $0x1b0] sm:$0xff]
    %v651 = vld [vmem:[#allocation2 + $0x1b8] sm:$0xff]
    %v652 = vld [vmem:[#allocation2 + $0x1c0] sm:$0xff]
    %v653 = vld [vmem:[#allocation2 + $0x1c8] sm:$0xff]
    %v654 = vld [vmem:[#allocation2 + $0x1d0] sm:$0x1]
    %v655 = vperm.slane %v654, 0
    %v657 = vsel %vm235, %v648, 0
    %v660 = vsel %vm235, %v649, 0
    %662 = vmatpush.msra.mxu0 0.0
    %663 = vmatpush.msra.mxu0 0.0
    %664 = vmatpush.msra.mxu0 0.0
    %665 = vmatpush.msra.mxu0 0.0
    %666 = vmatpush.msra.mxu0 0.0
    %667 = vmatpush.msra.mxu0 0.0
    %668 = vmatpush.msra.mxu0 0.0
    %669 = vmatpush.msra.mxu0 0.0
    %670 = vmatpush.msra.mxu0 0.0
    %671 = vmatpush.msra.mxu0 0.0
    %672 = vmatpush.msra.mxu0 0.0
    %673 = vmatpush.msra.mxu0 0.0
    %674 = vmatpush.msra.mxu0 %v653
    %675 = vmatpush.msra.mxu0 %v652
    %676 = vmatpush.msra.mxu0 %v651
    %677 = vmatpush.msra.mxu0 %v650
    %678 = vmatmul.f32.gmra.mxu0 %v657
    %v679 = vpop.f32.mrf.mxu0
    %v680 = vadd.f32 %v655, %v679
    %681 = vmatmul.f32.gmra.mxu0 %v660
    %v682 = vpop.f32.mrf.mxu0
    %v683 = vadd.f32 %v655, %v682
    %684 = vdwg.mxu0
    %685 = vst [vmem:[#allocation5] sm:$0xff] %v680
    %686 = vst [vmem:[#allocation5 + $0x8] sm:$0xff] %v683
    // Predicated region
    $region18: #{tpu_custom_call.1} parent=1 // pred_check
      _
    $region19: #{tpu_custom_call.1} parent=1 // pred_check_branch
      %688 = sbr.rel (0) target = $region21
    $region20: #{tpu_custom_call.1} parent=1 // pred_region
      %690 = vsyncadd [#allocation4], 0
      %s691 = sshll.u32 [#allocation5], 4
      %s692 = int_to_ptr.vmem [resolvable:$true] %s691
      %s693 = sshll.u32 %s3, 4
      %s694 = int_to_ptr.hbm [resolvable:$true] %s693
      %699 = dma.vmem_to_hbm [thread:$0]  %s692, 256, %s694, [#allocation4], 128, 128, 8
    $region21: #{tpu_custom_call.1} parent=1 // pred_fallthru
      _
    // Predicated region
    $region22: #{tpu_custom_call.1} parent=1 // pred_check
      _
    $region23: #{tpu_custom_call.1} parent=1 // pred_check_branch
      %701 = sbr.rel (0) target = $region25
    $region24: #{tpu_custom_call.1} parent=1 // pred_region
      %703 = dma.done [#allocation4], 256
    $region25: #{tpu_custom_call.1} parent=1 // pred_fallthru
      _
    %704 = vsyncpa [#allocation3], 1
    %705 = vsyncpa [#allocation4], 1

</llo_original>
